<compile_context>
chip_gen: v5e
topology: v5e:2x2
jax: 0.10.0
libtpu: 0.0.40
codegen_flags: <defaults>
</compile_context>

<pallas_src>
import functools
from typing import NamedTuple

import jax
import jax.numpy as jnp
from jax.experimental import pallas as pl
from jax.experimental.pallas import tpu as pltpu


def _gelu_tanh(x):
    # PyTorch nn.GELU(approximate='tanh'), computed in f32.
    return 0.5 * x * (1.0 + jnp.tanh(0.7978845608028654 * (x + 0.044715 * x * x * x)))


def _round_up(x, m):
    return (x + m - 1) // m * m


# ----------------------------------------------------------------------------- hardware queries
def _vmem_capacity_bytes():
    try:
        info = pltpu.get_tpu_info()
        for name in ("vmem_capacity_bytes", "vmem_size_bytes", "vmem_bytes"):
            cap = getattr(info, name, None)
            if cap:
                return int(cap)
    except Exception:
        pass
    return 64 * 2**20          # conservative (v7x per-TensorCore)


def _lane_multiple():
    # v6e/v7x MXUs are 2x256^2 -> prefer 256-aligned lane/contraction dims; <=v5 keeps 128.
    try:
        kind = jax.devices()[0].device_kind.lower()
        if any(t in kind for t in ("v2", "v3", "v4", "v5")):
            return 128
        return 256
    except Exception:
        return 128


def _preferred_tile_m(lane, vmem_cap):
    if lane == 128:
        return 256                       # v5e: ridge ~240 flop/byte, 256 already covers DMA
    if vmem_cap >= 100 * 2**20:
        return 512                       # v6e: 128 MiB VMEM, ridge ~650 -> raise AI
    return 384                           # v7x: 64 MiB VMEM, ridge ~311


_BUFFERED_OK = None


def _buffered_one_supported():
    """Probe once whether pipeline_mode=pl.Buffered(1) compiles/runs on this backend."""
    global _BUFFERED_OK
    if _BUFFERED_OK is not None:
        return _BUFFERED_OK
    try:
        def k(a_ref, b_ref, o_ref):
            o_ref[...] = a_ref[...] + b_ref[...]

        a = jnp.zeros((16, 128), jnp.float32)
        b = jnp.zeros((8, 128), jnp.float32)
        out = pl.pallas_call(
            k,
            out_shape=jax.ShapeDtypeStruct((16, 128), jnp.float32),
            grid=(2,),
            in_specs=[pl.BlockSpec((8, 128), lambda i: (i, 0)),
                      pl.BlockSpec((8, 128), lambda i: (0, 0),
                                   pipeline_mode=pl.Buffered(1))],
            out_specs=pl.BlockSpec((8, 128), lambda i: (i, 0)),
        )(a, b)
        jax.block_until_ready(out)
        _BUFFERED_OK = True
    except Exception:
        _BUFFERED_OK = False
    return _BUFFERED_OK


# ----------------------------------------------------------------------------- tiling selection
def _select_tiles(d_pad, inner, lane, vmem_cap, tm_pref, wo_buffers, io_bytes):
    """Pick (tile_m, tile_inner, inner_pad): largest tile_m / fewest inner steps that fit VMEM."""
    budget = int(0.80 * vmem_cap)
    inner_lane = _round_up(inner, lane)
    bf = 2                                  # bf16 weight bytes
    tm_candidates = sorted({t for t in (tm_pref, 384, 256, 128) if t <= tm_pref},
                           reverse=True) or [128]
    max_steps = max(1, inner_lane // lane)
    for tm in tm_candidates:
        for n_steps in range(1, max_steps + 1):
            ti = _round_up(-(-inner_lane // n_steps), lane)
            inner_pad = ti * n_steps
            need = (2 * tm * d_pad * io_bytes            # x tile (dbl-buffered, native dtype)
                    + 2 * d_pad * ti * bf                # W1 tile (dbl-buffered)
                    + 2 * 8 * ti * 4                     # b1 tile
                    + 2 * ti * d_pad * bf                # W2 tile (dbl-buffered)
                    + wo_buffers * d_pad * d_pad * bf    # Wo (single-buffered if supported)
                    + wo_buffers * 2 * 8 * d_pad * 4     # b2 + bo
                    + 4 * tm * d_pad * io_bytes          # out + ctrl tiles (dbl-buffered)
                    + tm * d_pad * 4                     # f32 accumulator scratch
                    + tm * ti * 6                        # h intermediate (f32 + bf16 copy)
                    + tm * d_pad * 6)                    # finalize temps (c f32 + bf16 copy)
            if need <= budget:
                return tm, ti, inner_pad
    return 128, lane, inner_lane             # smallest fallback


# ----------------------------------------------------------------------------- kernel
def _input_mapping_kernel(x_ref, w1_ref, b1_ref, w2_ref, b2_ref, wo_ref, bo_ref,
                          out_ref, ctrl_ref, c_acc_ref):
    j = pl.program_id(1)

    # proj-in slice over the inner axis: bf16 operands (cast on VPU), f32 MXU accumulation.
    x_low = x_ref[...].astype(w1_ref.dtype)
    h = jnp.dot(x_low, w1_ref[...], preferred_element_type=jnp.float32)
    h = _gelu_tanh(h + b1_ref[...])                       # f32 activation (v5e has no bf16 VPU/EUP)

    # proj-out partial sum for this inner slice.
    partial = jnp.dot(h.astype(w2_ref.dtype), w2_ref[...],
                      preferred_element_type=jnp.float32)

    @pl.when(j == 0)
    def _():
        c_acc_ref[...] = partial              # first step writes (no zero-fill pass)

    @pl.when(j > 0)
    def _():
        c_acc_ref[...] += partial

    @pl.when(j == pl.num_programs(1) - 1)
    def _():
        c = c_acc_ref[...] + b2_ref[...]
        ctrl_ref[...] = c.astype(ctrl_ref.dtype)
        # Zero-init out Linear, fed from the downcast control states (bf16 MXU path).
        c_low = c.astype(wo_ref.dtype)
        o = jnp.dot(c_low, wo_ref[...], preferred_element_type=jnp.float32) + bo_ref[...]
        out_ref[...] = o.astype(out_ref.dtype)


# ----------------------------------------------------------------------------- wrapper
class InputMappingConfig(NamedTuple):
    dim: int
    inner: int
    d_pad: int
    inner_pad: int
    tile_inner: int
    tile_m: int
    vmem_limit: int
    use_buffered_one: bool


def _pad2(a, r, c):
    pr, pc = r - a.shape[0], c - a.shape[1]
    if pr == 0 and pc == 0:
        return a
    return jnp.pad(a, ((0, pr), (0, pc)))


def _pad1(a, n):
    if n == a.shape[0]:
        return a
    return jnp.pad(a, (0, n - a.shape[0]))


def prepare_input_mapping_params(w1, b1, w2, b2, wo, bo, *, io_dtype=jnp.float32):
    """Pad + cast the weights ONCE (module-init time), pick tiles for this TPU generation.

    Weights use (in_features, out_features) layout. `io_dtype` is the expected dtype of the
    activations (x / outputs); it only affects VMEM budgeting, not numerics.
    """
    D, inner = w1.shape
    assert w2.shape == (inner, D) and wo.shape == (D, D)
    assert b1.shape == (inner,) and b2.shape == (D,) and bo.shape == (D,)

    vmem_cap = _vmem_capacity_bytes()
    lane = _lane_multiple()
    use_b1 = _buffered_one_supported()
    d_pad = _round_up(D, lane)
    tm_pref = _preferred_tile_m(lane, vmem_cap)
    io_bytes = jnp.dtype(io_dtype).itemsize
    tm, ti, inner_pad = _select_tiles(d_pad, inner, lane, vmem_cap, tm_pref,
                                      wo_buffers=1 if use_b1 else 2, io_bytes=io_bytes)

    # Zero padding is exact: padded columns/rows carry zero weights + zero bias, and
    # gelu(0) == 0, so the padded region contributes nothing to the valid outputs.
    cd = jnp.bfloat16
    w1p = _pad2(w1, d_pad, inner_pad).astype(cd)
    w2p = _pad2(w2, inner_pad, d_pad).astype(cd)
    wop = _pad2(wo, d_pad, d_pad).astype(cd)
    b1p = _pad1(b1, inner_pad).astype(jnp.float32).reshape(1, inner_pad)
    b2p = _pad1(b2, d_pad).astype(jnp.float32).reshape(1, d_pad)
    bop = _pad1(bo, d_pad).astype(jnp.float32).reshape(1, d_pad)

    cfg = InputMappingConfig(dim=D, inner=inner, d_pad=d_pad, inner_pad=inner_pad,
                             tile_inner=ti, tile_m=tm,
                             vmem_limit=int(0.85 * vmem_cap),
                             use_buffered_one=bool(use_b1))
    return (w1p, b1p, w2p, b2p, wop, bop), cfg


@functools.partial(jax.jit, static_argnames=("cfg",))
def input_mapping_block(x, params, cfg):
    """x: (B, S, D); params/cfg from prepare_input_mapping_params.
    Returns (output_hidden_states, control_hidden_states)."""
    w1p, b1p, w2p, b2p, wop, bop = params
    B, S, D = x.shape
    assert D == cfg.dim
    M = B * S
    d_pad, inner_pad, ti = cfg.d_pad, cfg.inner_pad, cfg.tile_inner
    tile_m = min(cfg.tile_m, _round_up(M, 16))
    M_pad = _round_up(M, tile_m)
    out_dtype = x.dtype
    ob = jnp.dtype(out_dtype).itemsize

    x2 = x.reshape(M, D)
    if M_pad != M or d_pad != D:
        x2 = jnp.pad(x2, ((0, M_pad - M), (0, d_pad - D)))     # native dtype; kernel casts to bf16

    grid_m = M_pad // tile_m
    grid_k = inner_pad // ti
    grid = (grid_m, grid_k)

    row_spec = pl.BlockSpec((tile_m, d_pad), lambda i, j: (i, 0))
    const_kwargs = dict(pipeline_mode=pl.Buffered(1)) if cfg.use_buffered_one else {}
    in_specs = [
        row_spec,                                                          # x tile
        pl.BlockSpec((d_pad, ti), lambda i, j: (0, j)),                    # W1 (inner-streamed)
        pl.BlockSpec((1, ti), lambda i, j: (0, j)),                        # b1
        pl.BlockSpec((ti, d_pad), lambda i, j: (j, 0)),                    # W2 (inner-streamed)
        pl.BlockSpec((1, d_pad), lambda i, j: (0, 0), **const_kwargs),     # b2 (constant idx)
        pl.BlockSpec((d_pad, d_pad), lambda i, j: (0, 0), **const_kwargs),  # Wo (constant idx)
        pl.BlockSpec((1, d_pad), lambda i, j: (0, 0), **const_kwargs),     # bo (constant idx)
    ]

    flops = 2 * M_pad * (2 * d_pad * inner_pad + d_pad * d_pad)
    w_stream = grid_m if grid_k > 1 else 1          # W1/W2 re-streamed per M tile if inner-tiled
    bytes_accessed = int(M_pad * d_pad * x2.dtype.itemsize
                         + (w1p.size + w2p.size) * 2 * w_stream
                         + wop.size * 2
                         + (b1p.size + b2p.size + bop.size) * 4
                         + 2 * M_pad * d_pad * ob)
    cost = pl.CostEstimate(flops=flops, transcendentals=M_pad * inner_pad,
                           bytes_accessed=bytes_accessed)

    out2, ctrl2 = pl.pallas_call(
        _input_mapping_kernel,
        out_shape=(jax.ShapeDtypeStruct((M_pad, d_pad), out_dtype),
                   jax.ShapeDtypeStruct((M_pad, d_pad), out_dtype)),
        grid_spec=pltpu.PrefetchScalarGridSpec(
            num_scalar_prefetch=0,
            grid=grid,
            in_specs=in_specs,
            out_specs=[row_spec, row_spec],
            scratch_shapes=[pltpu.VMEM((tile_m, d_pad), jnp.float32)]),
        compiler_params=pltpu.CompilerParams(
            dimension_semantics=("parallel", "arbitrary"),
            vmem_limit_bytes=cfg.vmem_limit),
        cost_estimate=cost,
    )(x2, w1p, b1p, w2p, b2p, wop, bop)

    if M_pad != M or d_pad != D:
        out2 = out2[:M, :D]
        ctrl2 = ctrl2[:M, :D]
    return out2.reshape(B, S, D), ctrl2.reshape(B, S, D)


# ----------------------------------------------------------------------------- reference
def _reference(x, w1, b1, w2, b2, wo, bo):
    # Mirrors the kernel's bf16-operand / f32-accumulate numerics.
    cd = jnp.bfloat16
    h = jnp.dot(x.astype(cd), w1.astype(cd), preferred_element_type=jnp.float32) + b1
    h = _gelu_tanh(h)
    c = jnp.dot(h.astype(cd), w2.astype(cd), preferred_element_type=jnp.float32) + b2
    o = jnp.dot(c.astype(cd), wo.astype(cd), preferred_element_type=jnp.float32) + bo
    return o.astype(x.dtype), c.astype(x.dtype)


if __name__ == "__main__":
    key = jax.random.PRNGKey(0)
    B, S, D = 2, 8, 32
    inner = 4 * D  # default FeedForward mult=4 (ff_inner_dim=None)

    k_x, k_w1, k_b1, k_w2, k_b2 = jax.random.split(key, 5)

    x = jax.random.normal(k_x, (B, S, D), dtype=jnp.float32)

    # FeedForward parameters, stored as (in_features, out_features) = torch weight.T
    w1 = jax.random.normal(k_w1, (D, inner), dtype=jnp.float32) * 0.05
    b1 = jax.random.normal(k_b1, (inner,), dtype=jnp.float32) * 0.05
    w2 = jax.random.normal(k_w2, (inner, D), dtype=jnp.float32) * 0.05
    b2 = jax.random.normal(k_b2, (D,), dtype=jnp.float32) * 0.05

    # zero_module(nn.Linear(dim, dim)) -> zero weights and bias.
    wo = jnp.zeros((D, D), dtype=jnp.float32)
    bo = jnp.zeros((D,), dtype=jnp.float32)

    # Pad/cast weights once (hoisted out of the per-call path).
    params, cfg = prepare_input_mapping_params(w1, b1, w2, b2, wo, bo, io_dtype=x.dtype)

    out, ctrl = input_mapping_block(x, params, cfg)
    out, ctrl = jax.block_until_ready(out), jax.block_until_ready(ctrl)

    ref_out, ref_ctrl = _reference(x, w1, b1, w2, b2, wo, bo)
    assert out.shape == (B, S, D) and ctrl.shape == (B, S, D)
    assert jnp.allclose(ctrl, ref_ctrl, atol=5e-3, rtol=5e-3)
    assert jnp.allclose(out, ref_out, atol=5e-3, rtol=5e-3)

    # TODO(synk): nonzero-p training dropout (needs pltpu.prng_*) is not implemented; p=0.0 is identity.
    print("KERNEL_OK")
</pallas_src>

<mosaic_0001>
module attributes {stable_mosaic.version = 11 : i64} {
  func.func @k(%arg0: i32, %arg1: memref<8x128xf32, #tpu.memory_space<vmem>>, %arg2: memref<8x128xf32, #tpu.memory_space<vmem>>, %arg3: memref<8x128xf32, #tpu.memory_space<vmem>>) attributes {dimension_semantics = [#tpu.dimension_semantics<arbitrary>], iteration_bounds = array<i64: 2>, scalar_prefetch = 0 : i64, scratch_operands = 0 : i64, tpu.core_type = #tpu.core_type<tc>, window_params = [{transform_indices = @transform_0, window_bounds = array<i64: 8, 128>}, {pipeline_mode = #tpu.pipeline_mode<synchronous>, transform_indices = @transform_1, window_bounds = array<i64: 8, 128>}, {transform_indices = @transform_2, window_bounds = array<i64: 8, 128>}]} {
    %c0 = arith.constant 0 : index
    %c0_0 = arith.constant 0 : index
    %0 = vector.load %arg1[%c0, %c0_0] : memref<8x128xf32, #tpu.memory_space<vmem>>, vector<8x128xf32>
    %c0_1 = arith.constant 0 : index
    %c0_2 = arith.constant 0 : index
    %1 = vector.load %arg2[%c0_1, %c0_2] : memref<8x128xf32, #tpu.memory_space<vmem>>, vector<8x128xf32>
    %2 = arith.addf %0, %1 : vector<8x128xf32>
    %c0_3 = arith.constant 0 : index
    %c0_4 = arith.constant 0 : index
    %3 = vector.load %arg3[%c0_3, %c0_4] : memref<8x128xf32, #tpu.memory_space<vmem>>, vector<8x128xf32>
    tpu.vector_store %arg3[%c0_3, %c0_4], %2 {strides = array<i32>} : memref<8x128xf32, #tpu.memory_space<vmem>>, vector<8x128xf32>,
    return
  }
  func.func @transform_0(%arg0: i32) -> (i32, i32) {
    %c0_i32 = arith.constant 0 : i32
    %c0_i32_0 = arith.constant 0 : i32
    return %arg0, %c0_i32 : i32, i32
  }
  func.func @transform_1(%arg0: i32) -> (i32, i32) {
    %c0_i32 = arith.constant 0 : i32
    %c0_i32_0 = arith.constant 0 : i32
    %c0_i32_1 = arith.constant 0 : i32
    return %c0_i32, %c0_i32_0 : i32, i32
  }
  func.func @transform_2(%arg0: i32) -> (i32, i32) {
    %c0_i32 = arith.constant 0 : i32
    %c0_i32_0 = arith.constant 0 : i32
    return %arg0, %c0_i32 : i32, i32
  }
}

module attributes {stable_mosaic.version = 11 : i64} {
  func.func @_input_mapping_kernel(%arg0: i32, %arg1: i32, %arg2: memref<16x256xf32, #tpu.memory_space<vmem>>, %arg3: memref<256x256xbf16, #tpu.memory_space<vmem>>, %arg4: memref<1x256xf32, #tpu.memory_space<vmem>>, %arg5: memref<256x256xbf16, #tpu.memory_space<vmem>>, %arg6: memref<1x256xf32, #tpu.memory_space<vmem>>, %arg7: memref<256x256xbf16, #tpu.memory_space<vmem>>, %arg8: memref<1x256xf32, #tpu.memory_space<vmem>>, %arg9: memref<16x256xf32, #tpu.memory_space<vmem>>, %arg10: memref<16x256xf32, #tpu.memory_space<vmem>>, %arg11: memref<16x256xf32, #tpu.memory_space<vmem>>) attributes {dimension_semantics = [#tpu.dimension_semantics<parallel>, #tpu.dimension_semantics<arbitrary>], iteration_bounds = array<i64: 1, 1>, scalar_prefetch = 0 : i64, scratch_operands = 1 : i64, tpu.core_type = #tpu.core_type<tc>, window_params = [{transform_indices = @transform_0, window_bounds = array<i64: 16, 256>}, {transform_indices = @transform_1, window_bounds = array<i64: 256, 256>}, {transform_indices = @transform_2, window_bounds = array<i64: 1, 256>}, {transform_indices = @transform_3, window_bounds = array<i64: 256, 256>}, {pipeline_mode = #tpu.pipeline_mode<synchronous>, transform_indices = @transform_4, window_bounds = array<i64: 1, 256>}, {pipeline_mode = #tpu.pipeline_mode<synchronous>, transform_indices = @transform_5, window_bounds = array<i64: 256, 256>}, {pipeline_mode = #tpu.pipeline_mode<synchronous>, transform_indices = @transform_6, window_bounds = array<i64: 1, 256>}, {transform_indices = @transform_7, window_bounds = array<i64: 16, 256>}, {transform_indices = @transform_8, window_bounds = array<i64: 16, 256>}]} {
    %c0 = arith.constant 0 : index
    %c0_0 = arith.constant 0 : index
    %0 = vector.load %arg2[%c0, %c0_0] : memref<16x256xf32, #tpu.memory_space<vmem>>, vector<16x256xf32>
    %1 = arith.truncf %0 : vector<16x256xf32> to vector<16x256xbf16>
    %c0_1 = arith.constant 0 : index
    %c0_2 = arith.constant 0 : index
    %2 = vector.load %arg3[%c0_1, %c0_2] : memref<256x256xbf16, #tpu.memory_space<vmem>>, vector<256x256xbf16>
    %cst = arith.constant dense<0.000000e+00> : vector<16x256xf32>
    %3 = tpu.matmul %1, %2, %cst {dimension_numbers = #tpu.dot_dimension_numbers<[1], [0], [0], [1], [0, 0, 1, 1], [], []>} : vector<16x256xbf16>, vector<256x256xbf16>, vector<16x256xf32> -> vector<16x256xf32>
    %c0_3 = arith.constant 0 : index
    %c0_4 = arith.constant 0 : index
    %4 = vector.load %arg4[%c0_3, %c0_4] : memref<1x256xf32, #tpu.memory_space<vmem>>, vector<1x256xf32>
    %5 = vector.broadcast %4 : vector<1x256xf32> to vector<16x256xf32>
    %6 = arith.addf %3, %5 : vector<16x256xf32>
    %cst_5 = arith.constant 5.000000e-01 : f32
    %7 = vector.broadcast %cst_5 : f32 to vector<16x256xf32>
    %8 = arith.mulf %7, %6 : vector<16x256xf32>
    %cst_6 = arith.constant 4.471500e-02 : f32
    %9 = vector.broadcast %cst_6 : f32 to vector<16x256xf32>
    %10 = arith.mulf %9, %6 : vector<16x256xf32>
    %11 = arith.mulf %10, %6 : vector<16x256xf32>
    %12 = arith.mulf %11, %6 : vector<16x256xf32>
    %13 = arith.addf %6, %12 : vector<16x256xf32>
    %cst_7 = arith.constant 0.797884583 : f32
    %14 = vector.broadcast %cst_7 : f32 to vector<16x256xf32>
    %15 = arith.mulf %14, %13 : vector<16x256xf32>
    %16 = math.tanh %15 : vector<16x256xf32>
    %cst_8 = arith.constant 1.000000e+00 : f32
    %17 = vector.broadcast %cst_8 : f32 to vector<16x256xf32>
    %18 = arith.addf %17, %16 : vector<16x256xf32>
    %19 = arith.mulf %8, %18 : vector<16x256xf32>
    %20 = arith.truncf %19 : vector<16x256xf32> to vector<16x256xbf16>
    %c0_9 = arith.constant 0 : index
    %c0_10 = arith.constant 0 : index
    %21 = vector.load %arg5[%c0_9, %c0_10] : memref<256x256xbf16, #tpu.memory_space<vmem>>, vector<256x256xbf16>
    %cst_11 = arith.constant dense<0.000000e+00> : vector<16x256xf32>
    %22 = tpu.matmul %20, %21, %cst_11 {dimension_numbers = #tpu.dot_dimension_numbers<[1], [0], [0], [1], [0, 0, 1, 1], [], []>} : vector<16x256xbf16>, vector<256x256xbf16>, vector<16x256xf32> -> vector<16x256xf32>
    %c0_i32 = arith.constant 0 : i32
    %23 = arith.cmpi eq, %arg1, %c0_i32 : i32
    %24 = arith.extui %23 : i1 to i32
    %c0_i32_12 = arith.constant 0 : i32
    %25 = arith.cmpi ne, %24, %c0_i32_12 : i32
    scf.if %25 {
      %c0_17 = arith.constant 0 : index
      %c0_18 = arith.constant 0 : index
      %32 = vector.load %arg11[%c0_17, %c0_18] : memref<16x256xf32, #tpu.memory_space<vmem>>, vector<16x256xf32>
      tpu.vector_store %arg11[%c0_17, %c0_18], %22 {strides = array<i32>} : memref<16x256xf32, #tpu.memory_space<vmem>>, vector<16x256xf32>,
    } else {
    }
    %c0_i32_13 = arith.constant 0 : i32
    %26 = arith.cmpi sgt, %arg1, %c0_i32_13 : i32
    %27 = arith.extui %26 : i1 to i32
    %c0_i32_14 = arith.constant 0 : i32
    %28 = arith.cmpi ne, %27, %c0_i32_14 : i32
    scf.if %28 {
      %c0_17 = arith.constant 0 : index
      %c0_18 = arith.constant 0 : index
      %32 = vector.load %arg11[%c0_17, %c0_18] : memref<16x256xf32, #tpu.memory_space<vmem>>, vector<16x256xf32>
      %33 = arith.addf %32, %22 : vector<16x256xf32>
      %c0_19 = arith.constant 0 : index
      %c0_20 = arith.constant 0 : index
      %34 = vector.load %arg11[%c0_19, %c0_20] : memref<16x256xf32, #tpu.memory_space<vmem>>, vector<16x256xf32>
      tpu.vector_store %arg11[%c0_19, %c0_20], %33 {strides = array<i32>} : memref<16x256xf32, #tpu.memory_space<vmem>>, vector<16x256xf32>,
    } else {
    }
    %c0_i32_15 = arith.constant 0 : i32
    %29 = arith.cmpi eq, %arg1, %c0_i32_15 : i32
    %30 = arith.extui %29 : i1 to i32
    %c0_i32_16 = arith.constant 0 : i32
    %31 = arith.cmpi ne, %30, %c0_i32_16 : i32
    scf.if %31 {
      %c0_17 = arith.constant 0 : index
      %c0_18 = arith.constant 0 : index
      %32 = vector.load %arg11[%c0_17, %c0_18] : memref<16x256xf32, #tpu.memory_space<vmem>>, vector<16x256xf32>
      %c0_19 = arith.constant 0 : index
      %c0_20 = arith.constant 0 : index
      %33 = vector.load %arg6[%c0_19, %c0_20] : memref<1x256xf32, #tpu.memory_space<vmem>>, vector<1x256xf32>
      %34 = vector.broadcast %33 : vector<1x256xf32> to vector<16x256xf32>
      %35 = arith.addf %32, %34 : vector<16x256xf32>
      %c0_21 = arith.constant 0 : index
      %c0_22 = arith.constant 0 : index
      %36 = vector.load %arg10[%c0_21, %c0_22] : memref<16x256xf32, #tpu.memory_space<vmem>>, vector<16x256xf32>
      tpu.vector_store %arg10[%c0_21, %c0_22], %35 {strides = array<i32>} : memref<16x256xf32, #tpu.memory_space<vmem>>, vector<16x256xf32>,
      %37 = arith.truncf %35 : vector<16x256xf32> to vector<16x256xbf16>
      %c0_23 = arith.constant 0 : index
      %c0_24 = arith.constant 0 : index
      %38 = vector.load %arg7[%c0_23, %c0_24] : memref<256x256xbf16, #tpu.memory_space<vmem>>, vector<256x256xbf16>
      %cst_25 = arith.constant dense<0.000000e+00> : vector<16x256xf32>
      %39 = tpu.matmul %37, %38, %cst_25 {dimension_numbers = #tpu.dot_dimension_numbers<[1], [0], [0], [1], [0, 0, 1, 1], [], []>} : vector<16x256xbf16>, vector<256x256xbf16>, vector<16x256xf32> -> vector<16x256xf32>
      %c0_26 = arith.constant 0 : index
      %c0_27 = arith.constant 0 : index
      %40 = vector.load %arg8[%c0_26, %c0_27] : memref<1x256xf32, #tpu.memory_space<vmem>>, vector<1x256xf32>
      %41 = vector.broadcast %40 : vector<1x256xf32> to vector<16x256xf32>
      %42 = arith.addf %39, %41 : vector<16x256xf32>
      %c0_28 = arith.constant 0 : index
      %c0_29 = arith.constant 0 : index
      %43 = vector.load %arg9[%c0_28, %c0_29] : memref<16x256xf32, #tpu.memory_space<vmem>>, vector<16x256xf32>
      tpu.vector_store %arg9[%c0_28, %c0_29], %42 {strides = array<i32>} : memref<16x256xf32, #tpu.memory_space<vmem>>, vector<16x256xf32>,
    } else {
    }
    return
  }
  func.func @transform_0(%arg0: i32, %arg1: i32) -> (i32, i32) {
    %c0_i32 = arith.constant 0 : i32
    %c0_i32_0 = arith.constant 0 : i32
    return %arg0, %c0_i32 : i32, i32
  }
  func.func @transform_1(%arg0: i32, %arg1: i32) -> (i32, i32) {
    %c0_i32 = arith.constant 0 : i32
    %c0_i32_0 = arith.constant 0 : i32
    return %c0_i32, %arg1 : i32, i32
  }
  func.func @transform_2(%arg0: i32, %arg1: i32) -> (i32, i32) {
    %c0_i32 = arith.constant 0 : i32
    %c0_i32_0 = arith.constant 0 : i32
    return %c0_i32, %arg1 : i32, i32
  }
  func.func @transform_3(%arg0: i32, %arg1: i32) -> (i32, i32) {
    %c0_i32 = arith.constant 0 : i32
    %c0_i32_0 = arith.constant 0 : i32
    return %arg1, %c0_i32 : i32, i32
  }
  func.func @transform_4(%arg0: i32, %arg1: i32) -> (i32, i32) {
    %c0_i32 = arith.constant 0 : i32
    %c0_i32_0 = arith.constant 0 : i32
    %c0_i32_1 = arith.constant 0 : i32
    return %c0_i32, %c0_i32_0 : i32, i32
  }
  func.func @transform_5(%arg0: i32, %arg1: i32) -> (i32, i32) {
    %c0_i32 = arith.constant 0 : i32
    %c0_i32_0 = arith.constant 0 : i32
    %c0_i32_1 = arith.constant 0 : i32
    return %c0_i32, %c0_i32_0 : i32, i32
  }
  func.func @transform_6(%arg0: i32, %arg1: i32) -> (i32, i32) {
    %c0_i32 = arith.constant 0 : i32
    %c0_i32_0 = arith.constant 0 : i32
    %c0_i32_1 = arith.constant 0 : i32
    return %c0_i32, %c0_i32_0 : i32, i32
  }
  func.func @transform_7(%arg0: i32, %arg1: i32) -> (i32, i32) {
    %c0_i32 = arith.constant 0 : i32
    %c0_i32_0 = arith.constant 0 : i32
    return %arg0, %c0_i32 : i32, i32
  }
  func.func @transform_8(%arg0: i32, %arg1: i32) -> (i32, i32) {
    %c0_i32 = arith.constant 0 : i32
    %c0_i32_0 = arith.constant 0 : i32
    return %arg0, %c0_i32 : i32, i32
  }
}

</mosaic_0001>

<llo_original>
// kernel: tpu_custom_call.1
$region0: #{tpu_custom_call.1}
  #allocation0 [shape = 'u32[]', space=smem, size = 0x4, offset = 0x4, fixed_abs, tag = 'smem constant byte address 0x4 - core index']
  #allocation1 [shape = 'u32[72,128]{1,0:T(1,128)}', space=vmem, size = 0x9000, scoped, tag = 'internal scratch']
  %s0 = inlined_call_operand.hbm [shape: f32[16,128], index: 0, kind: input, shape index: {}]
  %s1 = inlined_call_operand.hbm [shape: f32[8,128], index: 1, kind: input, shape index: {}]
  %s2 = inlined_call_operand.hbm [shape: f32[16,128], index: 2, kind: output, shape index: {}]
  %s3 = sld [smem:[#allocation0]]
  $region49: #{tpu_custom_call.1} parent=0
    _
  %s5 = ssub.s32 1, %s3
  %s6 = scalar_select 0, %s5, %s3
  $region1: #{tpu_custom_call.1} parent=0
    #allocation2 [shape = 'u8[8192]{0}', space=vmem, size = 0x2000, scoped, tag = 'input window, operand 0']
    #allocation3 [shape = 's32[2]{0}', space=sflag, size = 0x8, scoped, tag = 'scoped memory for tpu_custom_call.1']
    #allocation4 [shape = 's32[2]{0}', space=sflag, size = 0x8, scoped, tag = 'scoped memory for tpu_custom_call.1']
    #allocation5 [shape = 'u8[4096]{0}', space=vmem, size = 0x1000, scoped, tag = 'input window, operand 1, single buffered']
    #allocation6 [shape = 's32[1]{0}', space=sflag, size = 0x4, scoped, tag = 'scoped memory for tpu_custom_call.1']
    #allocation7 [shape = 'u8[8192]{0}', space=vmem, size = 0x2000, scoped, tag = 'output window, operand 0']
    %7 = vsyncpa [#allocation3], 0
    %s8 = scalar_lea.sflag [#allocation3], 1
    %9 = vsyncpa %s8, 0
    %10 = vsyncpa [#allocation6], 0
    %11 = vsyncpa [#allocation4], 0
    %s12 = scalar_lea.sflag [#allocation4], 1
    %13 = vsyncpa %s12, 0
    loop: start=0, step=1, limit=4
    $region2: #{tpu_custom_call.1} parent=1 // loop_pre_header
      _
    $region3: #{tpu_custom_call.1} parent=1 // loop_header
      %s15 = sphi 0, %s19
      %p16 = scmp.ge.s32.totalorder %s15, 4
      %s25 = sphi 0, %s27
      %s28 = sphi 0, %s25
      %s29 = sphi 0, %s28
      %s45 = sphi 0, %s29
      %s49 = sphi 0, %s49
      %s51 = sphi 0, %s49
      %s52 = sphi 0, %s51
      %s66 = sphi 0, %s52
      %s72 = sphi 0, %s74
      %s75 = sphi 0, %s72
      %s76 = sphi 0, %s75
      %s92 = sphi 0, %s76
    $region4: #{tpu_custom_call.1} parent=1 // loop_header_branch
      %18 = sbr.rel (%p16) target = $region8
    $region5: #{tpu_custom_call.1} parent=1 // loop_body
      %s20 = ssub.s32 %s15, 1
      %s21 = ssub.s32 %s15, 2
      %s22 = sadd.s32 %s15, 1
      %s23 = ssub.s32 %s15, %s22
      %p24 = scmp.eq.s32.totalorder %s23, 0
      %s26 = sadd.s32 %s25, 1
      %s27 = scalar_select %p24, %s25, %s26
      %p30 = pneg %p24
      %p31 = scmp.eq.s32.totalorder %s15, 1
      %p32 = por %p30, %p31
      %p33 = scmp.ne.s32.totalorder %s25, %s28
      %p34 = scmp.eq.s32.totalorder %s15, 0
      %p35 = por %p33, %p34
      %p36 = scmp.ne.s32.totalorder %s25, %s28
      %p37 = scmp.eq.s32.totalorder %s20, 1
      %p38 = por %p36, %p37
      %p39 = scmp.ne.s32.totalorder %s28, %s29
      %p40 = scmp.eq.s32.totalorder %s20, 0
      %p41 = por %p39, %p40
      %p42 = scmp.ne.s32.totalorder %s28, %s29
      %p43 = scmp.eq.s32.totalorder %s21, 1
      %p44 = por %p42, %p43
      %p46 = scmp.ne.s32.totalorder %s29, %s45
      %p47 = scmp.eq.s32.totalorder %s21, 0
      %p48 = por %p46, %p47
      %s50 = sadd.s32 %s49, 1
      %p53 = scmp.eq.s32.totalorder %s15, 1
      %p54 = scmp.ne.s32.totalorder %s49, %s51
      %p55 = scmp.eq.s32.totalorder %s15, 0
      %p56 = por %p54, %p55
      %p57 = scmp.ne.s32.totalorder %s49, %s51
      %p58 = scmp.eq.s32.totalorder %s20, 1
      %p59 = por %p57, %p58
      %p60 = scmp.ne.s32.totalorder %s51, %s52
      %p61 = scmp.eq.s32.totalorder %s20, 0
      %p62 = por %p60, %p61
      %p63 = scmp.ne.s32.totalorder %s51, %s52
      %p64 = scmp.eq.s32.totalorder %s21, 1
      %p65 = por %p63, %p64
      %p67 = scmp.ne.s32.totalorder %s52, %s66
      %p68 = scmp.eq.s32.totalorder %s21, 0
      %p69 = por %p67, %p68
      %s70 = ssub.s32 %s15, %s22
      %p71 = scmp.eq.s32.totalorder %s70, 0
      %s73 = sadd.s32 %s72, 1
      %s74 = scalar_select %p71, %s72, %s73
      %p77 = pneg %p71
      %p78 = scmp.eq.s32.totalorder %s15, 1
      %p79 = por %p77, %p78
      %p80 = scmp.ne.s32.totalorder %s72, %s75
      %p81 = scmp.eq.s32.totalorder %s15, 0
      %p82 = por %p80, %p81
      %p83 = scmp.ne.s32.totalorder %s72, %s75
      %p84 = scmp.eq.s32.totalorder %s20, 1
      %p85 = por %p83, %p84
      %p86 = scmp.ne.s32.totalorder %s75, %s76
      %p87 = scmp.eq.s32.totalorder %s20, 0
      %p88 = por %p86, %p87
      %p89 = scmp.ne.s32.totalorder %s75, %s76
      %p90 = scmp.eq.s32.totalorder %s21, 1
      %p91 = por %p89, %p90
      %p93 = scmp.ne.s32.totalorder %s76, %s92
      %p94 = scmp.eq.s32.totalorder %s21, 0
      %p95 = por %p93, %p94
      %p96 = scmp.le.s32.totalorder 1, %s15
      %p97 = scmp.lt.s32.totalorder %s15, 3
      %p98 = pnand %p96, %p97
      %p99 = pneg %p98
      // Predicated region
      $region9: #{tpu_custom_call.1} parent=5 // pred_check
        _
      $region10: #{tpu_custom_call.1} parent=5 // pred_check_branch
        %101 = sbr.rel (%p98) target = $region12
      $region11: #{tpu_custom_call.1} parent=5 // pred_region
        %s102 = ssub.s32 %s15, 1
        // Predicated region
        $region13: #{tpu_custom_call.1} parent=11 // pred_check
          %p103 = pneg %p62
        $region14: #{tpu_custom_call.1} parent=11 // pred_check_branch
          %105 = sbr.rel (%p103) target = $region16
        $region15: #{tpu_custom_call.1} parent=11 // pred_region
          %107 = vsyncadd [#allocation6], 0
          %s109 = sshll.u32 %s1, 4
          %s110 = int_to_ptr.hbm [resolvable:$true] %s109
          %s111 = sshll.u32 [#allocation5], 4
          %s112 = int_to_ptr.vmem [resolvable:$true] %s111
          %114 = dma.hbm_to_vmem [thread:$0]  %s110, 128, %s112, [#allocation6]
        $region16: #{tpu_custom_call.1} parent=11 // pred_fallthru
          _
      $region12: #{tpu_custom_call.1} parent=5 // pred_fallthru
        _
      %p115 = scmp.lt.s32.totalorder %s15, 2
      // Predicated region
      $region17: #{tpu_custom_call.1} parent=5 // pred_check
        %p116 = pneg %p115
      $region18: #{tpu_custom_call.1} parent=5 // pred_check_branch
        %118 = sbr.rel (%p116) target = $region20
      $region19: #{tpu_custom_call.1} parent=5 // pred_region
        // Predicated region
        $region21: #{tpu_custom_call.1} parent=19 // pred_check
          %p119 = pneg %p35
        $region22: #{tpu_custom_call.1} parent=19 // pred_check_branch
          %121 = sbr.rel (%p119) target = $region24
        $region23: #{tpu_custom_call.1} parent=19 // pred_region
          %s122 = sand.u32 %s25, 1
          %s123 = scalar_lea.sflag [#allocation3], %s122
          %s124 = sand.u32 %s25, 1
          %s125 = smul.addr %s124, 8
          %s126 = scalar_lea.vmem [#allocation2], %s125
          %128 = vsyncadd %s123, 0
          %s129 = smul.addr %s15, 8
          %s130 = scalar_lea.hbm %s0, %s129
          %s132 = sshll.u32 %s130, 4
          %s133 = int_to_ptr.hbm [resolvable:$true] %s132
          %s134 = sshll.u32 %s126, 4
          %s135 = int_to_ptr.vmem [resolvable:$true] %s134
          %137 = dma.hbm_to_vmem [thread:$0]  %s133, 128, %s135, %s123
        $region24: #{tpu_custom_call.1} parent=19 // pred_fallthru
          _
      $region20: #{tpu_custom_call.1} parent=5 // pred_fallthru
        _
      %p138 = scmp.le.s32.totalorder 1, %s15
      %p139 = scmp.lt.s32.totalorder %s15, 3
      %p140 = pnand %p138, %p139
      %p141 = pneg %p140
      // Predicated region
      $region25: #{tpu_custom_call.1} parent=5 // pred_check
        _
      $region26: #{tpu_custom_call.1} parent=5 // pred_check_branch
        %143 = sbr.rel (%p140) target = $region28
      $region27: #{tpu_custom_call.1} parent=5 // pred_region
        %s144 = ssub.s32 %s15, 1
        %s145 = sand.u32 %s28, 1
        %s146 = scalar_lea.sflag [#allocation3], %s145
        %s147 = sand.u32 %s28, 1
        %s148 = smul.addr %s147, 8
        %s149 = scalar_lea.vmem [#allocation2], %s148
        // Predicated region
        $region29: #{tpu_custom_call.1} parent=27 // pred_check
          %p150 = pneg %p41
        $region30: #{tpu_custom_call.1} parent=27 // pred_check_branch
          %152 = sbr.rel (%p150) target = $region32
        $region31: #{tpu_custom_call.1} parent=27 // pred_region
          %154 = dma.done %s146, 128
        $region32: #{tpu_custom_call.1} parent=27 // pred_fallthru
          _
        // Predicated region
        $region33: #{tpu_custom_call.1} parent=27 // pred_check
          %p155 = pneg %p62
        $region34: #{tpu_custom_call.1} parent=27 // pred_check_branch
          %157 = sbr.rel (%p155) target = $region36
        $region35: #{tpu_custom_call.1} parent=27 // pred_region
          %159 = dma.done [#allocation6], 128
        $region36: #{tpu_custom_call.1} parent=27 // pred_fallthru
          _
        %s160 = sand.u32 %s28, 1
        %s161 = scalar_lea.sflag [#allocation3], %s160
        %s162 = sand.u32 %s28, 1
        %s163 = smul.addr %s162, 8
        %s164 = scalar_lea.vmem [#allocation2], %s163
        %p165 = pneg %p41
        %p166 = pneg %p38
        %p167 = pneg %p62
        %p168 = pneg %p59
        %p169 = pneg %p88
        %p170 = pneg %p85
        %s171 = sand.u32 %s75, 1
        %s172 = scalar_lea.sflag [#allocation4], %s171
        %s173 = sand.u32 %s75, 1
        %s174 = smul.addr %s173, 8
        %s175 = scalar_lea.vmem [#allocation7], %s174
        %v176 = vld [vmem:[%s149] sm:$0xff]
        %v177 = vld [vmem:[#allocation5] sm:$0xff]
        %v178 = vadd.f32 %v176, %v177
        %179 = vst [vmem:[%s175] sm:$0xff] %v178
        %s180 = sand.u32 %s75, 1
        %s181 = scalar_lea.sflag [#allocation4], %s180
        %s182 = sand.u32 %s75, 1
        %s183 = smul.addr %s182, 8
        %s184 = scalar_lea.vmem [#allocation7], %s183
        // Predicated region
        $region37: #{tpu_custom_call.1} parent=27 // pred_check
          %p185 = pneg %p85
        $region38: #{tpu_custom_call.1} parent=27 // pred_check_branch
          %187 = sbr.rel (%p185) target = $region40
        $region39: #{tpu_custom_call.1} parent=27 // pred_region
          %189 = vsyncadd %s181, 0
          %s190 = smul.addr %s20, 8
          %s191 = scalar_lea.hbm %s2, %s190
          %s193 = sshll.u32 %s184, 4
          %s194 = int_to_ptr.vmem [resolvable:$true] %s193
          %s195 = sshll.u32 %s191, 4
          %s196 = int_to_ptr.hbm [resolvable:$true] %s195
          %198 = dma.vmem_to_hbm [thread:$0]  %s194, 128, %s196, %s181
        $region40: #{tpu_custom_call.1} parent=27 // pred_fallthru
          _
      $region28: #{tpu_custom_call.1} parent=5 // pred_fallthru
        _
      %p199 = scmp.le.s32.totalorder 2, %s15
      // Predicated region
      $region41: #{tpu_custom_call.1} parent=5 // pred_check
        %p200 = pneg %p199
      $region42: #{tpu_custom_call.1} parent=5 // pred_check_branch
        %202 = sbr.rel (%p200) target = $region44
      $region43: #{tpu_custom_call.1} parent=5 // pred_region
        %s203 = ssub.s32 %s15, 2
        // Predicated region
        $region45: #{tpu_custom_call.1} parent=43 // pred_check
          %p204 = pneg %p91
        $region46: #{tpu_custom_call.1} parent=43 // pred_check_branch
          %206 = sbr.rel (%p204) target = $region48
        $region47: #{tpu_custom_call.1} parent=43 // pred_region
          %s207 = sand.u32 %s76, 1
          %s208 = scalar_lea.sflag [#allocation4], %s207
          %s209 = sand.u32 %s76, 1
          %s210 = smul.addr %s209, 8
          %s211 = scalar_lea.vmem [#allocation7], %s210
          %213 = dma.done %s208, 128
        $region48: #{tpu_custom_call.1} parent=43 // pred_fallthru
          _
      $region44: #{tpu_custom_call.1} parent=5 // pred_fallthru
        _
    $region6: #{tpu_custom_call.1} parent=1 // loop_footer
      %s19 = sadd.s32 1, %s15
    $region7: #{tpu_custom_call.1} parent=1 // loop_footer_branch
      %14 = sbr.rel target = $region3
    $region8: #{tpu_custom_call.1} parent=1 // loop_exit
      _
    %214 = vsyncpa [#allocation3], 1
    %s215 = scalar_lea.sflag [#allocation3], 1
    %216 = vsyncpa %s215, 1
    %217 = vsyncpa [#allocation6], 1
    %218 = vsyncpa [#allocation4], 1
    %s219 = scalar_lea.sflag [#allocation4], 1
    %220 = vsyncpa %s219, 1

// kernel: input_mapping_block.1
$region0: #{input_mapping_block.1}
  #allocation0 [shape = 'u32[]', space=smem, size = 0x4, offset = 0x4, fixed_abs, tag = 'smem constant byte address 0x4 - core index']
  #allocation1 [shape = 'u32[72,128]{1,0:T(1,128)}', space=vmem, size = 0x9000, scoped, tag = 'internal scratch']
  #allocation2 [shape = 'f32[16,256]{1,0:T(8,128)}', space=vmem, size = 0x4000, scoped, tag = 'scratch operand']
  %s0 = inlined_call_operand.vmem [shape: f32[16,256], index: 0, kind: input, shape index: {}]
  %s1 = inlined_call_operand.hbm [shape: bf16[256,256], index: 1, kind: input, shape index: {}]
  %s2 = inlined_call_operand.vmem [shape: f32[1,256], index: 2, kind: input, shape index: {}]
  %s3 = inlined_call_operand.hbm [shape: bf16[256,256], index: 3, kind: input, shape index: {}]
  %s4 = inlined_call_operand.vmem [shape: f32[1,256], index: 4, kind: input, shape index: {}]
  %s5 = inlined_call_operand.hbm [shape: bf16[256,256], index: 5, kind: input, shape index: {}]
  %s6 = inlined_call_operand.vmem [shape: f32[1,256], index: 6, kind: input, shape index: {}]
  %s7 = inlined_call_operand.vmem [shape: f32[16,256], index: 7, kind: output, shape index: {0}]
  %s8 = inlined_call_operand.vmem [shape: f32[16,256], index: 8, kind: output, shape index: {1}]
  %9 = xla_tuple %s7, %s8
  %s10 = sld [smem:[#allocation0]]
  $region70: #{input_mapping_block.1} parent=0
    _
  %s12 = ssub.s32 1, %s10
  %s13 = scalar_select 0, %s12, %s10
  $region1: #{input_mapping_block.1} parent=0
    #allocation3 [shape = 'u8[131072]{0}', space=vmem, size = 0x20000, scoped, tag = 'input window, operand 1, single buffered']
    #allocation4 [shape = 's32[1]{0}', space=sflag, size = 0x4, scoped, tag = 'scoped memory for input_mapping_block.1']
    #allocation5 [shape = 'u8[131072]{0}', space=vmem, size = 0x20000, scoped, tag = 'input window, operand 3, single buffered']
    #allocation6 [shape = 's32[1]{0}', space=sflag, size = 0x4, scoped, tag = 'scoped memory for input_mapping_block.1']
    #allocation7 [shape = 'u8[131072]{0}', space=vmem, size = 0x20000, scoped, tag = 'input window, operand 5, single buffered']
    %14 = vsyncpa [#allocation4], 0
    %15 = vsyncpa [#allocation6], 0
    // Predicated region
    $region2: #{input_mapping_block.1} parent=1 // pred_check
      _
    $region3: #{input_mapping_block.1} parent=1 // pred_check_branch
      %17 = sbr.rel (0) target = $region5
    $region4: #{input_mapping_block.1} parent=1 // pred_region
      _
    $region5: #{input_mapping_block.1} parent=1 // pred_fallthru
      _
    // Predicated region
    $region6: #{input_mapping_block.1} parent=1 // pred_check
      _
    $region7: #{input_mapping_block.1} parent=1 // pred_check_branch
      %19 = sbr.rel (0) target = $region9
    $region8: #{input_mapping_block.1} parent=1 // pred_region
      %21 = vsyncadd [#allocation4], 0
      %s22 = sshll.u32 %s1, 4
      %s23 = int_to_ptr.hbm [resolvable:$true] %s22
      %s24 = sshll.u32 [#allocation3], 4
      %s25 = int_to_ptr.vmem [resolvable:$true] %s24
      %30 = dma.hbm_to_vmem [thread:$0]  %s23, 4096, %s25, [#allocation4], 128, 128, 8
    $region9: #{input_mapping_block.1} parent=1 // pred_fallthru
      _
    // Predicated region
    $region10: #{input_mapping_block.1} parent=1 // pred_check
      _
    $region11: #{input_mapping_block.1} parent=1 // pred_check_branch
      %32 = sbr.rel (0) target = $region13
    $region12: #{input_mapping_block.1} parent=1 // pred_region
      _
    $region13: #{input_mapping_block.1} parent=1 // pred_fallthru
      _
    // Predicated region
    $region14: #{input_mapping_block.1} parent=1 // pred_check
      _
    $region15: #{input_mapping_block.1} parent=1 // pred_check_branch
      %34 = sbr.rel (0) target = $region17
    $region16: #{input_mapping_block.1} parent=1 // pred_region
      %36 = vsyncadd [#allocation6], 0
      %s37 = sshll.u32 %s3, 4
      %s38 = int_to_ptr.hbm [resolvable:$true] %s37
      %s39 = sshll.u32 [#allocation5], 4
      %s40 = int_to_ptr.vmem [resolvable:$true] %s39
      %45 = dma.hbm_to_vmem [thread:$0]  %s38, 4096, %s40, [#allocation6], 128, 128, 8
    $region17: #{input_mapping_block.1} parent=1 // pred_fallthru
      _
    // Predicated region
    $region18: #{input_mapping_block.1} parent=1 // pred_check
      _
    $region19: #{input_mapping_block.1} parent=1 // pred_check_branch
      %47 = sbr.rel (0) target = $region21
    $region20: #{input_mapping_block.1} parent=1 // pred_region
      _
    $region21: #{input_mapping_block.1} parent=1 // pred_fallthru
      _
    // Predicated region
    $region22: #{input_mapping_block.1} parent=1 // pred_check
      _
    $region23: #{input_mapping_block.1} parent=1 // pred_check_branch
      %49 = sbr.rel (0) target = $region25
    $region24: #{input_mapping_block.1} parent=1 // pred_region
      %51 = vsyncadd [#allocation6], 0
      %s52 = sshll.u32 %s5, 4
      %s53 = int_to_ptr.hbm [resolvable:$true] %s52
      %s54 = sshll.u32 [#allocation7], 4
      %s55 = int_to_ptr.vmem [resolvable:$true] %s54
      %60 = dma.hbm_to_vmem [thread:$0]  %s53, 4096, %s55, [#allocation6], 128, 128, 8
    $region25: #{input_mapping_block.1} parent=1 // pred_fallthru
      _
    // Predicated region
    $region26: #{input_mapping_block.1} parent=1 // pred_check
      _
    $region27: #{input_mapping_block.1} parent=1 // pred_check_branch
      %62 = sbr.rel (0) target = $region29
    $region28: #{input_mapping_block.1} parent=1 // pred_region
      _
    $region29: #{input_mapping_block.1} parent=1 // pred_fallthru
      _
    // Predicated region
    $region30: #{input_mapping_block.1} parent=1 // pred_check
      _
    $region31: #{input_mapping_block.1} parent=1 // pred_check_branch
      %64 = sbr.rel (0) target = $region33
    $region32: #{input_mapping_block.1} parent=1 // pred_region
      %66 = dma.done [#allocation4], 4096
    $region33: #{input_mapping_block.1} parent=1 // pred_fallthru
      _
    // Predicated region
    $region34: #{input_mapping_block.1} parent=1 // pred_check
      _
    $region35: #{input_mapping_block.1} parent=1 // pred_check_branch
      %68 = sbr.rel (0) target = $region37
    $region36: #{input_mapping_block.1} parent=1 // pred_region
      %70 = dma.done [#allocation6], 4096
    $region37: #{input_mapping_block.1} parent=1 // pred_fallthru
      _
    // Predicated region
    $region38: #{input_mapping_block.1} parent=1 // pred_check
      _
    $region39: #{input_mapping_block.1} parent=1 // pred_check_branch
      %72 = sbr.rel (0) target = $region41
    $region40: #{input_mapping_block.1} parent=1 // pred_region
      %74 = dma.done [#allocation6], 4096
    $region41: #{input_mapping_block.1} parent=1 // pred_fallthru
      _
    %v75 = vld [vmem:[%s0] sm:$0xff]
    %v76 = vld [vmem:[%s0 + $0x8] sm:$0xff]
    %v77 = vld [vmem:[%s0 + $0x10] sm:$0xff]
    %v78 = vld [vmem:[%s0 + $0x18] sm:$0xff]
    %v79 = vpack.c.bf16 %v77, %v75
    %v80 = vpack.c.bf16 %v78, %v76
    %v81 = vld [vmem:[#allocation3] sm:$0xff]
    %v82 = vld [vmem:[#allocation3 + $0x8] sm:$0xff]
    %v83 = vld [vmem:[#allocation3 + $0x10] sm:$0xff]
    %v84 = vld [vmem:[#allocation3 + $0x18] sm:$0xff]
    %v85 = vld [vmem:[#allocation3 + $0x20] sm:$0xff]
    %v86 = vld [vmem:[#allocation3 + $0x28] sm:$0xff]
    %v87 = vld [vmem:[#allocation3 + $0x30] sm:$0xff]
    %v88 = vld [vmem:[#allocation3 + $0x38] sm:$0xff]
    %v89 = vld [vmem:[#allocation3 + $0x40] sm:$0xff]
    %v90 = vld [vmem:[#allocation3 + $0x48] sm:$0xff]
    %v91 = vld [vmem:[#allocation3 + $0x50] sm:$0xff]
    %v92 = vld [vmem:[#allocation3 + $0x58] sm:$0xff]
    %v93 = vld [vmem:[#allocation3 + $0x60] sm:$0xff]
    %v94 = vld [vmem:[#allocation3 + $0x68] sm:$0xff]
    %v95 = vld [vmem:[#allocation3 + $0x70] sm:$0xff]
    %v96 = vld [vmem:[#allocation3 + $0x78] sm:$0xff]
    %v97 = vld [vmem:[#allocation3 + $0x80] sm:$0xff]
    %v98 = vld [vmem:[#allocation3 + $0x88] sm:$0xff]
    %v99 = vld [vmem:[#allocation3 + $0x90] sm:$0xff]
    %v100 = vld [vmem:[#allocation3 + $0x98] sm:$0xff]
    %v101 = vld [vmem:[#allocation3 + $0xa0] sm:$0xff]
    %v102 = vld [vmem:[#allocation3 + $0xa8] sm:$0xff]
    %v103 = vld [vmem:[#allocation3 + $0xb0] sm:$0xff]
    %v104 = vld [vmem:[#allocation3 + $0xb8] sm:$0xff]
    %v105 = vld [vmem:[#allocation3 + $0xc0] sm:$0xff]
    %v106 = vld [vmem:[#allocation3 + $0xc8] sm:$0xff]
    %v107 = vld [vmem:[#allocation3 + $0xd0] sm:$0xff]
    %v108 = vld [vmem:[#allocation3 + $0xd8] sm:$0xff]
    %v109 = vld [vmem:[#allocation3 + $0xe0] sm:$0xff]
    %v110 = vld [vmem:[#allocation3 + $0xe8] sm:$0xff]
    %v111 = vld [vmem:[#allocation3 + $0xf0] sm:$0xff]
    %v112 = vld [vmem:[#allocation3 + $0xf8] sm:$0xff]
    %v113 = vld [vmem:[%s2] sm:$0x3]
    %v115 = vperm.slane %v113, 0
    %v116 = vperm.slane %v113, 1
    %v151 = vunpack.c.l.b16 %v81
    %v152 = vunpack.c.h.b16 %v81
    %v153 = vunpack.c.l.b16 %v82
    %v154 = vunpack.c.h.b16 %v82
    %v155 = vunpack.c.l.b16 %v83
    %v156 = vunpack.c.h.b16 %v83
    %v157 = vunpack.c.l.b16 %v84
    %v158 = vunpack.c.h.b16 %v84
    %v159 = vunpack.c.l.b16 %v85
    %v160 = vunpack.c.h.b16 %v85
    %v161 = vunpack.c.l.b16 %v86
    %v162 = vunpack.c.h.b16 %v86
    %v163 = vunpack.c.l.b16 %v87
    %v164 = vunpack.c.h.b16 %v87
    %v165 = vunpack.c.l.b16 %v88
    %v166 = vunpack.c.h.b16 %v88
    %v167 = vunpack.c.l.b16 %v89
    %v168 = vunpack.c.h.b16 %v89
    %v169 = vunpack.c.l.b16 %v90
    %v170 = vunpack.c.h.b16 %v90
    %v171 = vunpack.c.l.b16 %v91
    %v172 = vunpack.c.h.b16 %v91
    %v173 = vunpack.c.l.b16 %v92
    %v174 = vunpack.c.h.b16 %v92
    %v175 = vunpack.c.l.b16 %v93
    %v176 = vunpack.c.h.b16 %v93
    %v177 = vunpack.c.l.b16 %v94
    %v178 = vunpack.c.h.b16 %v94
    %v179 = vunpack.c.l.b16 %v95
    %v180 = vunpack.c.h.b16 %v95
    %v181 = vunpack.c.l.b16 %v96
    %v182 = vunpack.c.h.b16 %v96
    %v183 = vunpack.c.l.b16 %v97
    %v184 = vunpack.c.h.b16 %v97
    %v185 = vunpack.c.l.b16 %v98
    %v186 = vunpack.c.h.b16 %v98
    %v187 = vunpack.c.l.b16 %v99
    %v188 = vunpack.c.h.b16 %v99
    %v189 = vunpack.c.l.b16 %v100
    %v190 = vunpack.c.h.b16 %v100
    %v191 = vunpack.c.l.b16 %v101
    %v192 = vunpack.c.h.b16 %v101
    %v193 = vunpack.c.l.b16 %v102
    %v194 = vunpack.c.h.b16 %v102
    %v195 = vunpack.c.l.b16 %v103
    %v196 = vunpack.c.h.b16 %v103
    %v197 = vunpack.c.l.b16 %v104
    %v198 = vunpack.c.h.b16 %v104
    %v199 = vunpack.c.l.b16 %v105
    %v200 = vunpack.c.h.b16 %v105
    %v201 = vunpack.c.l.b16 %v106
    %v202 = vunpack.c.h.b16 %v106
    %v203 = vunpack.c.l.b16 %v107
    %v204 = vunpack.c.h.b16 %v107
    %v205 = vunpack.c.l.b16 %v108
    %v206 = vunpack.c.h.b16 %v108
    %v207 = vunpack.c.l.b16 %v109
    %v208 = vunpack.c.h.b16 %v109
    %v209 = vunpack.c.l.b16 %v110
    %v210 = vunpack.c.h.b16 %v110
    %v211 = vunpack.c.l.b16 %v111
    %v212 = vunpack.c.h.b16 %v111
    %v213 = vunpack.c.l.b16 %v112
    %v214 = vunpack.c.h.b16 %v112
    %v215 = vpack.c.b16 %v153, %v151
    %v216 = vpack.c.b16 %v154, %v152
    %v217 = vpack.c.b16 %v157, %v155
    %v218 = vpack.c.b16 %v158, %v156
    %v219 = vpack.c.b16 %v161, %v159
    %v220 = vpack.c.b16 %v162, %v160
    %v221 = vpack.c.b16 %v165, %v163
    %v222 = vpack.c.b16 %v166, %v164
    %v223 = vpack.c.b16 %v169, %v167
    %v224 = vpack.c.b16 %v170, %v168
    %v225 = vpack.c.b16 %v173, %v171
    %v226 = vpack.c.b16 %v174, %v172
    %v227 = vpack.c.b16 %v177, %v175
    %v228 = vpack.c.b16 %v178, %v176
    %v229 = vpack.c.b16 %v181, %v179
    %v230 = vpack.c.b16 %v182, %v180
    %v231 = vpack.c.b16 %v185, %v183
    %v232 = vpack.c.b16 %v186, %v184
    %v233 = vpack.c.b16 %v189, %v187
    %v234 = vpack.c.b16 %v190, %v188
    %v235 = vpack.c.b16 %v193, %v191
    %v236 = vpack.c.b16 %v194, %v192
    %v237 = vpack.c.b16 %v197, %v195
    %v238 = vpack.c.b16 %v198, %v196
    %v239 = vpack.c.b16 %v201, %v199
    %v240 = vpack.c.b16 %v202, %v200
    %v241 = vpack.c.b16 %v205, %v203
    %v242 = vpack.c.b16 %v206, %v204
    %v243 = vpack.c.b16 %v209, %v207
    %v244 = vpack.c.b16 %v210, %v208
    %v245 = vpack.c.b16 %v213, %v211
    %v246 = vpack.c.b16 %v214, %v212
    %279 = vmatpush.bf16.msra.mxu0 %v229
    %280 = vmatpush.bf16.msra.mxu0 %v227
    %281 = vmatpush.bf16.msra.mxu0 %v225
    %282 = vmatpush.bf16.msra.mxu0 %v223
    %283 = vmatpush.bf16.msra.mxu0 %v221
    %284 = vmatpush.bf16.msra.mxu0 %v219
    %285 = vmatpush.bf16.msra.mxu0 %v217
    %286 = vmatpush.bf16.msra.mxu0 %v215
    %287 = vmatmul.bf16.gmra.mxu0 %v79
    %v288 = vpop.f32.mrf.mxu0
    %v289 = vadd.f32 %v115, %v288
    %v290 = vpop.f32.mrf.mxu0
    %v291 = vadd.f32 %v115, %v290
    %292 = vdwg.mxu0
    %293 = vmatpush.bf16.msra.mxu0 %v245
    %294 = vmatpush.bf16.msra.mxu0 %v243
    %295 = vmatpush.bf16.msra.mxu0 %v241
    %296 = vmatpush.bf16.msra.mxu0 %v239
    %297 = vmatpush.bf16.msra.mxu0 %v237
    %298 = vmatpush.bf16.msra.mxu0 %v235
    %299 = vmatpush.bf16.msra.mxu0 %v233
    %300 = vmatpush.bf16.msra.mxu0 %v231
    %301 = vmatmul.bf16.gmra.mxu0 %v80
    %v302 = vpop.f32.mrf.mxu0
    %v303 = vadd.f32 %v289, %v302
    %v304 = vpop.f32.mrf.mxu0
    %v305 = vadd.f32 %v291, %v304
    %306 = vdwg.mxu0
    %307 = vmatpush.bf16.msra.mxu0 %v230
    %308 = vmatpush.bf16.msra.mxu0 %v228
    %309 = vmatpush.bf16.msra.mxu0 %v226
    %310 = vmatpush.bf16.msra.mxu0 %v224
    %311 = vmatpush.bf16.msra.mxu0 %v222
    %312 = vmatpush.bf16.msra.mxu0 %v220
    %313 = vmatpush.bf16.msra.mxu0 %v218
    %314 = vmatpush.bf16.msra.mxu0 %v216
    %315 = vmatmul.bf16.gmra.mxu0 %v79
    %v316 = vpop.f32.mrf.mxu0
    %v317 = vadd.f32 %v116, %v316
    %v318 = vpop.f32.mrf.mxu0
    %v319 = vadd.f32 %v116, %v318
    %320 = vdwg.mxu0
    %321 = vmatpush.bf16.msra.mxu0 %v246
    %322 = vmatpush.bf16.msra.mxu0 %v244
    %323 = vmatpush.bf16.msra.mxu0 %v242
    %324 = vmatpush.bf16.msra.mxu0 %v240
    %325 = vmatpush.bf16.msra.mxu0 %v238
    %326 = vmatpush.bf16.msra.mxu0 %v236
    %327 = vmatpush.bf16.msra.mxu0 %v234
    %328 = vmatpush.bf16.msra.mxu0 %v232
    %329 = vmatmul.bf16.gmra.mxu0 %v80
    %v330 = vpop.f32.mrf.mxu0
    %v331 = vadd.f32 %v317, %v330
    %v332 = vpop.f32.mrf.mxu0
    %v333 = vadd.f32 %v319, %v332
    %334 = vdwg.mxu0
    %v335 = vmul.f32 %v303, 0.5
    %v336 = vmul.f32 %v331, 0.5
    %v337 = vmul.f32 %v305, 0.5
    %v338 = vmul.f32 %v333, 0.5
    %v339 = vmul.f32 %v303, 0.044715
    %v340 = vmul.f32 %v331, 0.044715
    %v341 = vmul.f32 %v305, 0.044715
    %v342 = vmul.f32 %v333, 0.044715
    %v343 = vmul.f32 %v339, %v303
    %v344 = vmul.f32 %v340, %v331
    %v345 = vmul.f32 %v341, %v305
    %v346 = vmul.f32 %v342, %v333
    %v347 = vmul.f32 %v343, %v303
    %v348 = vmul.f32 %v344, %v331
    %v349 = vmul.f32 %v345, %v305
    %v350 = vmul.f32 %v346, %v333
    %v351 = vadd.f32 %v303, %v347
    %v352 = vadd.f32 %v331, %v348
    %v353 = vadd.f32 %v305, %v349
    %v354 = vadd.f32 %v333, %v350
    %v355 = vmul.f32 %v351, 0.7978846
    %v356 = vmul.f32 %v352, 0.7978846
    %v357 = vmul.f32 %v353, 0.7978846
    %v358 = vmul.f32 %v354, 0.7978846
    %v359 = vtanh.pop %v355
    %v360 = vtanh.pop %v356
    %v361 = vtanh.pop %v357
    %v362 = vtanh.pop %v358
    %v363 = vadd.f32 %v359, 1.0
    %v364 = vadd.f32 %v360, 1.0
    %v365 = vadd.f32 %v361, 1.0
    %v366 = vadd.f32 %v362, 1.0
    %v367 = vmul.f32 %v335, %v363
    %v368 = vmul.f32 %v336, %v364
    %v369 = vmul.f32 %v337, %v365
    %v370 = vmul.f32 %v338, %v366
    %v371 = vpack.c.bf16 %v369, %v367
    %v372 = vpack.c.bf16 %v370, %v368
    %v373 = vld [vmem:[#allocation5] sm:$0xff]
    %v374 = vld [vmem:[#allocation5 + $0x8] sm:$0xff]
    %v375 = vld [vmem:[#allocation5 + $0x10] sm:$0xff]
    %v376 = vld [vmem:[#allocation5 + $0x18] sm:$0xff]
    %v377 = vld [vmem:[#allocation5 + $0x20] sm:$0xff]
    %v378 = vld [vmem:[#allocation5 + $0x28] sm:$0xff]
    %v379 = vld [vmem:[#allocation5 + $0x30] sm:$0xff]
    %v380 = vld [vmem:[#allocation5 + $0x38] sm:$0xff]
    %v381 = vld [vmem:[#allocation5 + $0x40] sm:$0xff]
    %v382 = vld [vmem:[#allocation5 + $0x48] sm:$0xff]
    %v383 = vld [vmem:[#allocation5 + $0x50] sm:$0xff]
    %v384 = vld [vmem:[#allocation5 + $0x58] sm:$0xff]
    %v385 = vld [vmem:[#allocation5 + $0x60] sm:$0xff]
    %v386 = vld [vmem:[#allocation5 + $0x68] sm:$0xff]
    %v387 = vld [vmem:[#allocation5 + $0x70] sm:$0xff]
    %v388 = vld [vmem:[#allocation5 + $0x78] sm:$0xff]
    %v389 = vld [vmem:[#allocation5 + $0x80] sm:$0xff]
    %v390 = vld [vmem:[#allocation5 + $0x88] sm:$0xff]
    %v391 = vld [vmem:[#allocation5 + $0x90] sm:$0xff]
    %v392 = vld [vmem:[#allocation5 + $0x98] sm:$0xff]
    %v393 = vld [vmem:[#allocation5 + $0xa0] sm:$0xff]
    %v394 = vld [vmem:[#allocation5 + $0xa8] sm:$0xff]
    %v395 = vld [vmem:[#allocation5 + $0xb0] sm:$0xff]
    %v396 = vld [vmem:[#allocation5 + $0xb8] sm:$0xff]
    %v397 = vld [vmem:[#allocation5 + $0xc0] sm:$0xff]
    %v398 = vld [vmem:[#allocation5 + $0xc8] sm:$0xff]
    %v399 = vld [vmem:[#allocation5 + $0xd0] sm:$0xff]
    %v400 = vld [vmem:[#allocation5 + $0xd8] sm:$0xff]
    %v401 = vld [vmem:[#allocation5 + $0xe0] sm:$0xff]
    %v402 = vld [vmem:[#allocation5 + $0xe8] sm:$0xff]
    %v403 = vld [vmem:[#allocation5 + $0xf0] sm:$0xff]
    %v404 = vld [vmem:[#allocation5 + $0xf8] sm:$0xff]
    %v437 = vunpack.c.l.b16 %v373
    %v438 = vunpack.c.h.b16 %v373
    %v439 = vunpack.c.l.b16 %v374
    %v440 = vunpack.c.h.b16 %v374
    %v441 = vunpack.c.l.b16 %v375
    %v442 = vunpack.c.h.b16 %v375
    %v443 = vunpack.c.l.b16 %v376
    %v444 = vunpack.c.h.b16 %v376
    %v445 = vunpack.c.l.b16 %v377
    %v446 = vunpack.c.h.b16 %v377
    %v447 = vunpack.c.l.b16 %v378
    %v448 = vunpack.c.h.b16 %v378
    %v449 = vunpack.c.l.b16 %v379
    %v450 = vunpack.c.h.b16 %v379
    %v451 = vunpack.c.l.b16 %v380
    %v452 = vunpack.c.h.b16 %v380
    %v453 = vunpack.c.l.b16 %v381
    %v454 = vunpack.c.h.b16 %v381
    %v455 = vunpack.c.l.b16 %v382
    %v456 = vunpack.c.h.b16 %v382
    %v457 = vunpack.c.l.b16 %v383
    %v458 = vunpack.c.h.b16 %v383
    %v459 = vunpack.c.l.b16 %v384
    %v460 = vunpack.c.h.b16 %v384
    %v461 = vunpack.c.l.b16 %v385
    %v462 = vunpack.c.h.b16 %v385
    %v463 = vunpack.c.l.b16 %v386
    %v464 = vunpack.c.h.b16 %v386
    %v465 = vunpack.c.l.b16 %v387
    %v466 = vunpack.c.h.b16 %v387
    %v467 = vunpack.c.l.b16 %v388
    %v468 = vunpack.c.h.b16 %v388
    %v469 = vunpack.c.l.b16 %v389
    %v470 = vunpack.c.h.b16 %v389
    %v471 = vunpack.c.l.b16 %v390
    %v472 = vunpack.c.h.b16 %v390
    %v473 = vunpack.c.l.b16 %v391
    %v474 = vunpack.c.h.b16 %v391
    %v475 = vunpack.c.l.b16 %v392
    %v476 = vunpack.c.h.b16 %v392
    %v477 = vunpack.c.l.b16 %v393
    %v478 = vunpack.c.h.b16 %v393
    %v479 = vunpack.c.l.b16 %v394
    %v480 = vunpack.c.h.b16 %v394
    %v481 = vunpack.c.l.b16 %v395
    %v482 = vunpack.c.h.b16 %v395
    %v483 = vunpack.c.l.b16 %v396
    %v484 = vunpack.c.h.b16 %v396
    %v485 = vunpack.c.l.b16 %v397
    %v486 = vunpack.c.h.b16 %v397
    %v487 = vunpack.c.l.b16 %v398
    %v488 = vunpack.c.h.b16 %v398
    %v489 = vunpack.c.l.b16 %v399
    %v490 = vunpack.c.h.b16 %v399
    %v491 = vunpack.c.l.b16 %v400
    %v492 = vunpack.c.h.b16 %v400
    %v493 = vunpack.c.l.b16 %v401
    %v494 = vunpack.c.h.b16 %v401
    %v495 = vunpack.c.l.b16 %v402
    %v496 = vunpack.c.h.b16 %v402
    %v497 = vunpack.c.l.b16 %v403
    %v498 = vunpack.c.h.b16 %v403
    %v499 = vunpack.c.l.b16 %v404
    %v500 = vunpack.c.h.b16 %v404
    %v501 = vpack.c.b16 %v439, %v437
    %v502 = vpack.c.b16 %v440, %v438
    %v503 = vpack.c.b16 %v443, %v441
    %v504 = vpack.c.b16 %v444, %v442
    %v505 = vpack.c.b16 %v447, %v445
    %v506 = vpack.c.b16 %v448, %v446
    %v507 = vpack.c.b16 %v451, %v449
    %v508 = vpack.c.b16 %v452, %v450
    %v509 = vpack.c.b16 %v455, %v453
    %v510 = vpack.c.b16 %v456, %v454
    %v511 = vpack.c.b16 %v459, %v457
    %v512 = vpack.c.b16 %v460, %v458
    %v513 = vpack.c.b16 %v463, %v461
    %v514 = vpack.c.b16 %v464, %v462
    %v515 = vpack.c.b16 %v467, %v465
    %v516 = vpack.c.b16 %v468, %v466
    %v517 = vpack.c.b16 %v471, %v469
    %v518 = vpack.c.b16 %v472, %v470
    %v519 = vpack.c.b16 %v475, %v473
    %v520 = vpack.c.b16 %v476, %v474
    %v521 = vpack.c.b16 %v479, %v477
    %v522 = vpack.c.b16 %v480, %v478
    %v523 = vpack.c.b16 %v483, %v481
    %v524 = vpack.c.b16 %v484, %v482
    %v525 = vpack.c.b16 %v487, %v485
    %v526 = vpack.c.b16 %v488, %v486
    %v527 = vpack.c.b16 %v491, %v489
    %v528 = vpack.c.b16 %v492, %v490
    %v529 = vpack.c.b16 %v495, %v493
    %v530 = vpack.c.b16 %v496, %v494
    %v531 = vpack.c.b16 %v499, %v497
    %v532 = vpack.c.b16 %v500, %v498
    %565 = vmatpush.bf16.msra.mxu0 %v515
    %566 = vmatpush.bf16.msra.mxu0 %v513
    %567 = vmatpush.bf16.msra.mxu0 %v511
    %568 = vmatpush.bf16.msra.mxu0 %v509
    %569 = vmatpush.bf16.msra.mxu0 %v507
    %570 = vmatpush.bf16.msra.mxu0 %v505
    %571 = vmatpush.bf16.msra.mxu0 %v503
    %572 = vmatpush.bf16.msra.mxu0 %v501
    %573 = vmatmul.bf16.gmra.mxu0 %v371
    %v574 = vpop.f32.mrf.mxu0
    %v575 = vadd.f32 0.0, %v574
    %v576 = vpop.f32.mrf.mxu0
    %v577 = vadd.f32 0.0, %v576
    %578 = vdwg.mxu0
    %579 = vmatpush.bf16.msra.mxu0 %v531
    %580 = vmatpush.bf16.msra.mxu0 %v529
    %581 = vmatpush.bf16.msra.mxu0 %v527
    %582 = vmatpush.bf16.msra.mxu0 %v525
    %583 = vmatpush.bf16.msra.mxu0 %v523
    %584 = vmatpush.bf16.msra.mxu0 %v521
    %585 = vmatpush.bf16.msra.mxu0 %v519
    %586 = vmatpush.bf16.msra.mxu0 %v517
    %587 = vmatmul.bf16.gmra.mxu0 %v372
    %v588 = vpop.f32.mrf.mxu0
    %v589 = vadd.f32 %v575, %v588
    %v590 = vpop.f32.mrf.mxu0
    %v591 = vadd.f32 %v577, %v590
    %592 = vdwg.mxu0
    %593 = vmatpush.bf16.msra.mxu0 %v516
    %594 = vmatpush.bf16.msra.mxu0 %v514
    %595 = vmatpush.bf16.msra.mxu0 %v512
    %596 = vmatpush.bf16.msra.mxu0 %v510
    %597 = vmatpush.bf16.msra.mxu0 %v508
    %598 = vmatpush.bf16.msra.mxu0 %v506
    %599 = vmatpush.bf16.msra.mxu0 %v504
    %600 = vmatpush.bf16.msra.mxu0 %v502
    %601 = vmatmul.bf16.gmra.mxu0 %v371
    %v602 = vpop.f32.mrf.mxu0
    %v603 = vadd.f32 0.0, %v602
    %v604 = vpop.f32.mrf.mxu0
    %v605 = vadd.f32 0.0, %v604
    %606 = vdwg.mxu0
    %607 = vmatpush.bf16.msra.mxu0 %v532
    %608 = vmatpush.bf16.msra.mxu0 %v530
    %609 = vmatpush.bf16.msra.mxu0 %v528
    %610 = vmatpush.bf16.msra.mxu0 %v526
    %611 = vmatpush.bf16.msra.mxu0 %v524
    %612 = vmatpush.bf16.msra.mxu0 %v522
    %613 = vmatpush.bf16.msra.mxu0 %v520
    %614 = vmatpush.bf16.msra.mxu0 %v518
    %615 = vmatmul.bf16.gmra.mxu0 %v372
    %v616 = vpop.f32.mrf.mxu0
    %v617 = vadd.f32 %v603, %v616
    %v618 = vpop.f32.mrf.mxu0
    %v619 = vadd.f32 %v605, %v618
    %620 = vdwg.mxu0
    %p621 = scmp.eq.s32.totalorder 0, 0
    // Predicated region
    $region42: #{input_mapping_block.1} parent=1 // pred_check
      %p622 = pneg %p621
    $region43: #{input_mapping_block.1} parent=1 // pred_check_branch
      %624 = sbr.rel (%p622) target = $region45
    $region44: #{input_mapping_block.1} parent=1 // pred_region
      %625 = vst [vmem:[#allocation2] sm:$0xff] %v589
      %626 = vst [vmem:[#allocation2 + $0x8] sm:$0xff] %v617
      %627 = vst [vmem:[#allocation2 + $0x10] sm:$0xff] %v591
      %628 = vst [vmem:[#allocation2 + $0x18] sm:$0xff] %v619
    $region45: #{input_mapping_block.1} parent=1 // pred_fallthru
      _
    %p629 = scmp.gt.s32.totalorder 0, 0
    // Predicated region
    $region46: #{input_mapping_block.1} parent=1 // pred_check
      %p630 = pneg %p629
    $region47: #{input_mapping_block.1} parent=1 // pred_check_branch
      %632 = sbr.rel (%p630) target = $region49
    $region48: #{input_mapping_block.1} parent=1 // pred_region
      %v633 = vld [vmem:[#allocation2] sm:$0xff]
      %v634 = vld [vmem:[#allocation2 + $0x8] sm:$0xff]
      %v635 = vld [vmem:[#allocation2 + $0x10] sm:$0xff]
      %v636 = vld [vmem:[#allocation2 + $0x18] sm:$0xff]
      %v637 = vadd.f32 %v633, %v589
      %v638 = vadd.f32 %v634, %v617
      %v639 = vadd.f32 %v635, %v591
      %v640 = vadd.f32 %v636, %v619
      %641 = vst [vmem:[#allocation2] sm:$0xff] %v637
      %642 = vst [vmem:[#allocation2 + $0x8] sm:$0xff] %v638
      %643 = vst [vmem:[#allocation2 + $0x10] sm:$0xff] %v639
      %644 = vst [vmem:[#allocation2 + $0x18] sm:$0xff] %v640
    $region49: #{input_mapping_block.1} parent=1 // pred_fallthru
      _
    // Predicated region
    $region50: #{input_mapping_block.1} parent=1 // pred_check
      %p645 = pneg %p621
    $region51: #{input_mapping_block.1} parent=1 // pred_check_branch
      %647 = sbr.rel (%p645) target = $region53
    $region52: #{input_mapping_block.1} parent=1 // pred_region
      %v648 = vld [vmem:[#allocation2] sm:$0xff]
      %v649 = vld [vmem:[#allocation2 + $0x8] sm:$0xff]
      %v650 = vld [vmem:[#allocation2 + $0x10] sm:$0xff]
      %v651 = vld [vmem:[#allocation2 + $0x18] sm:$0xff]
      %v652 = vld [vmem:[%s4] sm:$0x3]
      %v654 = vperm.slane %v652, 0
      %v655 = vperm.slane %v652, 1
      %v658 = vadd.f32 %v648, %v654
      %v659 = vadd.f32 %v649, %v655
      %v660 = vadd.f32 %v650, %v654
      %v661 = vadd.f32 %v651, %v655
      %662 = vst [vmem:[%s8] sm:$0xff] %v658
      %663 = vst [vmem:[%s8 + $0x8] sm:$0xff] %v659
      %664 = vst [vmem:[%s8 + $0x10] sm:$0xff] %v660
      %665 = vst [vmem:[%s8 + $0x18] sm:$0xff] %v661
      %v666 = vpack.c.bf16 %v660, %v658
      %v667 = vpack.c.bf16 %v661, %v659
      %v668 = vld [vmem:[#allocation7] sm:$0xff]
      %v669 = vld [vmem:[#allocation7 + $0x8] sm:$0xff]
      %v670 = vld [vmem:[#allocation7 + $0x10] sm:$0xff]
      %v671 = vld [vmem:[#allocation7 + $0x18] sm:$0xff]
      %v672 = vld [vmem:[#allocation7 + $0x20] sm:$0xff]
      %v673 = vld [vmem:[#allocation7 + $0x28] sm:$0xff]
      %v674 = vld [vmem:[#allocation7 + $0x30] sm:$0xff]
      %v675 = vld [vmem:[#allocation7 + $0x38] sm:$0xff]
      %v676 = vld [vmem:[#allocation7 + $0x40] sm:$0xff]
      %v677 = vld [vmem:[#allocation7 + $0x48] sm:$0xff]
      %v678 = vld [vmem:[#allocation7 + $0x50] sm:$0xff]
      %v679 = vld [vmem:[#allocation7 + $0x58] sm:$0xff]
      %v680 = vld [vmem:[#allocation7 + $0x60] sm:$0xff]
      %v681 = vld [vmem:[#allocation7 + $0x68] sm:$0xff]
      %v682 = vld [vmem:[#allocation7 + $0x70] sm:$0xff]
      %v683 = vld [vmem:[#allocation7 + $0x78] sm:$0xff]
      %v684 = vld [vmem:[#allocation7 + $0x80] sm:$0xff]
      %v685 = vld [vmem:[#allocation7 + $0x88] sm:$0xff]
      %v686 = vld [vmem:[#allocation7 + $0x90] sm:$0xff]
      %v687 = vld [vmem:[#allocation7 + $0x98] sm:$0xff]
      %v688 = vld [vmem:[#allocation7 + $0xa0] sm:$0xff]
      %v689 = vld [vmem:[#allocation7 + $0xa8] sm:$0xff]
      %v690 = vld [vmem:[#allocation7 + $0xb0] sm:$0xff]
      %v691 = vld [vmem:[#allocation7 + $0xb8] sm:$0xff]
      %v692 = vld [vmem:[#allocation7 + $0xc0] sm:$0xff]
      %v693 = vld [vmem:[#allocation7 + $0xc8] sm:$0xff]
      %v694 = vld [vmem:[#allocation7 + $0xd0] sm:$0xff]
      %v695 = vld [vmem:[#allocation7 + $0xd8] sm:$0xff]
      %v696 = vld [vmem:[#allocation7 + $0xe0] sm:$0xff]
      %v697 = vld [vmem:[#allocation7 + $0xe8] sm:$0xff]
      %v698 = vld [vmem:[#allocation7 + $0xf0] sm:$0xff]
      %v699 = vld [vmem:[#allocation7 + $0xf8] sm:$0xff]
      %v700 = vld [vmem:[%s6] sm:$0x3]
      %v702 = vperm.slane %v700, 0
      %v703 = vperm.slane %v700, 1
      %v738 = vunpack.c.l.b16 %v668
      %v739 = vunpack.c.h.b16 %v668
      %v740 = vunpack.c.l.b16 %v669
      %v741 = vunpack.c.h.b16 %v669
      %v742 = vunpack.c.l.b16 %v670
      %v743 = vunpack.c.h.b16 %v670
      %v744 = vunpack.c.l.b16 %v671
      %v745 = vunpack.c.h.b16 %v671
      %v746 = vunpack.c.l.b16 %v672
      %v747 = vunpack.c.h.b16 %v672
      %v748 = vunpack.c.l.b16 %v673
      %v749 = vunpack.c.h.b16 %v673
      %v750 = vunpack.c.l.b16 %v674
      %v751 = vunpack.c.h.b16 %v674
      %v752 = vunpack.c.l.b16 %v675
      %v753 = vunpack.c.h.b16 %v675
      %v754 = vunpack.c.l.b16 %v676
      %v755 = vunpack.c.h.b16 %v676
      %v756 = vunpack.c.l.b16 %v677
      %v757 = vunpack.c.h.b16 %v677
      %v758 = vunpack.c.l.b16 %v678
      %v759 = vunpack.c.h.b16 %v678
      %v760 = vunpack.c.l.b16 %v679
      %v761 = vunpack.c.h.b16 %v679
      %v762 = vunpack.c.l.b16 %v680
      %v763 = vunpack.c.h.b16 %v680
      %v764 = vunpack.c.l.b16 %v681
      %v765 = vunpack.c.h.b16 %v681
      %v766 = vunpack.c.l.b16 %v682
      %v767 = vunpack.c.h.b16 %v682
      %v768 = vunpack.c.l.b16 %v683
      %v769 = vunpack.c.h.b16 %v683
      %v770 = vunpack.c.l.b16 %v684
      %v771 = vunpack.c.h.b16 %v684
      %v772 = vunpack.c.l.b16 %v685
      %v773 = vunpack.c.h.b16 %v685
      %v774 = vunpack.c.l.b16 %v686
      %v775 = vunpack.c.h.b16 %v686
      %v776 = vunpack.c.l.b16 %v687
      %v777 = vunpack.c.h.b16 %v687
      %v778 = vunpack.c.l.b16 %v688
      %v779 = vunpack.c.h.b16 %v688
      %v780 = vunpack.c.l.b16 %v689
      %v781 = vunpack.c.h.b16 %v689
      %v782 = vunpack.c.l.b16 %v690
      %v783 = vunpack.c.h.b16 %v690
      %v784 = vunpack.c.l.b16 %v691
      %v785 = vunpack.c.h.b16 %v691
      %v786 = vunpack.c.l.b16 %v692
      %v787 = vunpack.c.h.b16 %v692
      %v788 = vunpack.c.l.b16 %v693
      %v789 = vunpack.c.h.b16 %v693
      %v790 = vunpack.c.l.b16 %v694
      %v791 = vunpack.c.h.b16 %v694
      %v792 = vunpack.c.l.b16 %v695
      %v793 = vunpack.c.h.b16 %v695
      %v794 = vunpack.c.l.b16 %v696
      %v795 = vunpack.c.h.b16 %v696
      %v796 = vunpack.c.l.b16 %v697
      %v797 = vunpack.c.h.b16 %v697
      %v798 = vunpack.c.l.b16 %v698
      %v799 = vunpack.c.h.b16 %v698
      %v800 = vunpack.c.l.b16 %v699
      %v801 = vunpack.c.h.b16 %v699
      %v802 = vpack.c.b16 %v740, %v738
      %v803 = vpack.c.b16 %v741, %v739
      %v804 = vpack.c.b16 %v744, %v742
      %v805 = vpack.c.b16 %v745, %v743
      %v806 = vpack.c.b16 %v748, %v746
      %v807 = vpack.c.b16 %v749, %v747
      %v808 = vpack.c.b16 %v752, %v750
      %v809 = vpack.c.b16 %v753, %v751
      %v810 = vpack.c.b16 %v756, %v754
      %v811 = vpack.c.b16 %v757, %v755
      %v812 = vpack.c.b16 %v760, %v758
      %v813 = vpack.c.b16 %v761, %v759
      %v814 = vpack.c.b16 %v764, %v762
      %v815 = vpack.c.b16 %v765, %v763
      %v816 = vpack.c.b16 %v768, %v766
      %v817 = vpack.c.b16 %v769, %v767
      %v818 = vpack.c.b16 %v772, %v770
      %v819 = vpack.c.b16 %v773, %v771
      %v820 = vpack.c.b16 %v776, %v774
      %v821 = vpack.c.b16 %v777, %v775
      %v822 = vpack.c.b16 %v780, %v778
      %v823 = vpack.c.b16 %v781, %v779
      %v824 = vpack.c.b16 %v784, %v782
      %v825 = vpack.c.b16 %v785, %v783
      %v826 = vpack.c.b16 %v788, %v786
      %v827 = vpack.c.b16 %v789, %v787
      %v828 = vpack.c.b16 %v792, %v790
      %v829 = vpack.c.b16 %v793, %v791
      %v830 = vpack.c.b16 %v796, %v794
      %v831 = vpack.c.b16 %v797, %v795
      %v832 = vpack.c.b16 %v800, %v798
      %v833 = vpack.c.b16 %v801, %v799
      %866 = vmatpush.bf16.msra.mxu0 %v816
      %867 = vmatpush.bf16.msra.mxu0 %v814
      %868 = vmatpush.bf16.msra.mxu0 %v812
      %869 = vmatpush.bf16.msra.mxu0 %v810
      %870 = vmatpush.bf16.msra.mxu0 %v808
      %871 = vmatpush.bf16.msra.mxu0 %v806
      %872 = vmatpush.bf16.msra.mxu0 %v804
      %873 = vmatpush.bf16.msra.mxu0 %v802
      %874 = vmatmul.bf16.gmra.mxu0 %v666
      %v875 = vpop.f32.mrf.mxu0
      %v876 = vadd.f32 %v702, %v875
      %v877 = vpop.f32.mrf.mxu0
      %v878 = vadd.f32 %v702, %v877
      %879 = vdwg.mxu0
      %880 = vmatpush.bf16.msra.mxu0 %v832
      %881 = vmatpush.bf16.msra.mxu0 %v830
      %882 = vmatpush.bf16.msra.mxu0 %v828
      %883 = vmatpush.bf16.msra.mxu0 %v826
      %884 = vmatpush.bf16.msra.mxu0 %v824
      %885 = vmatpush.bf16.msra.mxu0 %v822
      %886 = vmatpush.bf16.msra.mxu0 %v820
      %887 = vmatpush.bf16.msra.mxu0 %v818
      %888 = vmatmul.bf16.gmra.mxu0 %v667
      %v889 = vpop.f32.mrf.mxu0
      %v890 = vadd.f32 %v876, %v889
      %v891 = vpop.f32.mrf.mxu0
      %v892 = vadd.f32 %v878, %v891
      %893 = vdwg.mxu0
      %894 = vmatpush.bf16.msra.mxu0 %v817
      %895 = vmatpush.bf16.msra.mxu0 %v815
      %896 = vmatpush.bf16.msra.mxu0 %v813
      %897 = vmatpush.bf16.msra.mxu0 %v811
      %898 = vmatpush.bf16.msra.mxu0 %v809
      %899 = vmatpush.bf16.msra.mxu0 %v807
      %900 = vmatpush.bf16.msra.mxu0 %v805
      %901 = vmatpush.bf16.msra.mxu0 %v803
      %902 = vmatmul.bf16.gmra.mxu0 %v666
      %v903 = vpop.f32.mrf.mxu0
      %v904 = vadd.f32 %v703, %v903
      %v905 = vpop.f32.mrf.mxu0
      %v906 = vadd.f32 %v703, %v905
      %907 = vdwg.mxu0
      %908 = vmatpush.bf16.msra.mxu0 %v833
      %909 = vmatpush.bf16.msra.mxu0 %v831
      %910 = vmatpush.bf16.msra.mxu0 %v829
      %911 = vmatpush.bf16.msra.mxu0 %v827
      %912 = vmatpush.bf16.msra.mxu0 %v825
      %913 = vmatpush.bf16.msra.mxu0 %v823
      %914 = vmatpush.bf16.msra.mxu0 %v821
      %915 = vmatpush.bf16.msra.mxu0 %v819
      %916 = vmatmul.bf16.gmra.mxu0 %v667
      %v917 = vpop.f32.mrf.mxu0
      %v918 = vadd.f32 %v904, %v917
      %v919 = vpop.f32.mrf.mxu0
      %v920 = vadd.f32 %v906, %v919
      %921 = vdwg.mxu0
      %922 = vst [vmem:[%s7] sm:$0xff] %v890
      %923 = vst [vmem:[%s7 + $0x8] sm:$0xff] %v918
      %924 = vst [vmem:[%s7 + $0x10] sm:$0xff] %v892
      %925 = vst [vmem:[%s7 + $0x18] sm:$0xff] %v920
    $region53: #{input_mapping_block.1} parent=1 // pred_fallthru
      _
    // Predicated region
    $region54: #{input_mapping_block.1} parent=1 // pred_check
      _
    $region55: #{input_mapping_block.1} parent=1 // pred_check_branch
      %927 = sbr.rel (0) target = $region57
    $region56: #{input_mapping_block.1} parent=1 // pred_region
      _
    $region57: #{input_mapping_block.1} parent=1 // pred_fallthru
      _
    // Predicated region
    $region58: #{input_mapping_block.1} parent=1 // pred_check
      _
    $region59: #{input_mapping_block.1} parent=1 // pred_check_branch
      %929 = sbr.rel (0) target = $region61
    $region60: #{input_mapping_block.1} parent=1 // pred_region
      _
    $region61: #{input_mapping_block.1} parent=1 // pred_fallthru
      _
    // Predicated region
    $region62: #{input_mapping_block.1} parent=1 // pred_check
      _
    $region63: #{input_mapping_block.1} parent=1 // pred_check_branch
      %931 = sbr.rel (0) target = $region65
    $region64: #{input_mapping_block.1} parent=1 // pred_region
      _
    $region65: #{input_mapping_block.1} parent=1 // pred_fallthru
      _
    // Predicated region
    $region66: #{input_mapping_block.1} parent=1 // pred_check
      _
    $region67: #{input_mapping_block.1} parent=1 // pred_check_branch
      %933 = sbr.rel (0) target = $region69
    $region68: #{input_mapping_block.1} parent=1 // pred_region
      _
    $region69: #{input_mapping_block.1} parent=1 // pred_fallthru
      _
    %934 = vsyncpa [#allocation4], 1
    %935 = vsyncpa [#allocation6], 1

</llo_original>
